<compile_context>
chip_gen: v5e
topology: v5e:2x2
jax: 0.10.0
libtpu: 0.0.40
codegen_flags: <defaults>
</compile_context>

<pallas_src>
import jax
import jax.numpy as jnp
from jax import lax
from jax.experimental import pallas as pl
from jax.experimental.pallas import tpu as pltpu


def _cov_sum_kernel(x_ref, o_ref):
    """Accumulate sum_b xc_b @ xc_b^T over the batch-block reduction axis.

    x_ref: (B_BLK, C, T) VMEM tile of batches for grid point (split p, block i)
    o_ref: (1, C, C)     partial-sum tile for split p (resident across i)
    """
    i = pl.program_id(1)

    @pl.when(i == 0)
    def _():
        o_ref[...] = jnp.zeros_like(o_ref)

    x = x_ref[...].astype(jnp.float32)                      # (B_BLK, C, T)
    xc = x - jnp.mean(x, axis=2, keepdims=True)             # center along time

    # Batched, transpose-free xc @ xc^T: contract over T, batch over B_BLK.
    prods = lax.dot_general(
        xc, xc,
        dimension_numbers=(((2,), (2,)), ((0,), (0,))),
        preferred_element_type=jnp.float32)                 # (B_BLK, C, C)

    o_ref[...] += jnp.sum(prods, axis=0, keepdims=True)     # (1, C, C)


def euclidean_mean(X, *, target_block_bytes=4 * 1024 * 1024):
    """Pallas implementation of EuclideanMean.forward."""
    X = jnp.squeeze(X)                                      # mirror torch.squeeze
    assert X.ndim == 3, "expected (nbatch, nchannel, time) after squeeze"
    B, C, T = X.shape
    assert T > 1, "torch.cov is unbiased; needs at least 2 observations"

    # Two partial sums for megacore when the batch splits evenly; otherwise one.
    num_splits = 2 if (B >= 4 and B % 2 == 0) else 1
    per_split = pl.cdiv(B, num_splits)

    # Pick a batch block so each (double-buffered) input tile is a few MiB;
    # prefer a divisor of per_split so no zero-padding / extra HBM copy is needed.
    bytes_per_batch = C * T * 4
    cand = max(1, min(per_split, target_block_bytes // bytes_per_batch))
    b_blk = cand
    for d in range(cand, max(1, cand // 2) - 1, -1):
        if per_split % d == 0:
            b_blk = d
            break
    nblocks = pl.cdiv(per_split, b_blk)
    b_pad = num_splits * nblocks * b_blk

    Xf = X.astype(jnp.float32)
    if b_pad != B:
        # Zero-padded batches are exactly zero after centering -> contribute 0.
        Xf = jnp.pad(Xf, ((0, b_pad - B), (0, 0), (0, 0)))

    cost = pl.CostEstimate(
        flops=2 * b_pad * C * C * T + 2 * b_pad * C * T,
        transcendentals=0,
        bytes_accessed=b_pad * C * T * 4 + num_splits * C * C * 4,
    )

    partials = pl.pallas_call(
        _cov_sum_kernel,
        out_shape=jax.ShapeDtypeStruct((num_splits, C, C), jnp.float32),
        grid_spec=pltpu.PrefetchScalarGridSpec(
            num_scalar_prefetch=0,
            grid=(num_splits, nblocks),
            in_specs=[pl.BlockSpec((b_blk, C, T),
                                   lambda p, i: (p * nblocks + i, 0, 0))],
            out_specs=pl.BlockSpec((1, C, C), lambda p, i: (p, 0, 0)),
        ),
        compiler_params=pltpu.CompilerParams(
            dimension_semantics=("parallel", "arbitrary"),
            vmem_limit_bytes=32 * 1024 * 1024,
        ),
        cost_estimate=cost,
    )(Xf)

    # Hoisted finalize (exact: trace and mean are linear):
    #   mean_b[cov_b + 1e-3 tr(cov_b) I] == mean_cov + 1e-3 tr(mean_cov) I
    mean_cov = jnp.sum(partials, axis=0) / (B * (T - 1))
    return mean_cov + 0.001 * jnp.trace(mean_cov) * jnp.eye(C, dtype=jnp.float32)


def _reference(X):
    """Plain-JAX reference matching the PyTorch module semantics."""
    X = jnp.squeeze(X)
    B, C, T = X.shape
    xc = X - jnp.mean(X, axis=2, keepdims=True)
    cov = jnp.einsum("bct,bdt->bcd", xc, xc) / (T - 1)
    tr = jnp.trace(cov, axis1=1, axis2=2)
    spd = cov + 0.001 * tr[:, None, None] * jnp.eye(C, dtype=X.dtype)
    return jnp.mean(spd, axis=0)


if __name__ == "__main__":
    key = jax.random.PRNGKey(0)
    B, C, T = 4, 8, 128
    # 4-D input with a singleton dim, squeezed to (B, C, T) like the module.
    X = jax.random.normal(key, (B, 1, C, T), dtype=jnp.float32)

    out = jax.block_until_ready(euclidean_mean(X))
    ref = jax.block_until_ready(_reference(X))

    assert out.shape == (C, C)
    assert jnp.allclose(out, ref, atol=1e-4, rtol=1e-4), (
        f"max abs err = {jnp.max(jnp.abs(out - ref))}"
    )
    print("KERNEL_OK")
</pallas_src>

<mosaic_0001>
module attributes {stable_mosaic.version = 11 : i64} {
  func.func @_cov_sum_kernel(%arg0: i32, %arg1: i32, %arg2: memref<2x8x128xf32, #tpu.memory_space<vmem>>, %arg3: memref<1x8x8xf32, #tpu.memory_space<vmem>>) attributes {dimension_semantics = [#tpu.dimension_semantics<parallel>, #tpu.dimension_semantics<arbitrary>], iteration_bounds = array<i64: 2, 1>, scalar_prefetch = 0 : i64, scratch_operands = 0 : i64, tpu.core_type = #tpu.core_type<tc>, window_params = [{transform_indices = @transform_0, window_bounds = array<i64: 2, 8, 128>}, {transform_indices = @transform_1, window_bounds = array<i64: 1, 8, 8>}]} {
    %c0_i32 = arith.constant 0 : i32
    %0 = arith.cmpi eq, %arg1, %c0_i32 : i32
    %1 = arith.extui %0 : i1 to i32
    %c0_i32_0 = arith.constant 0 : i32
    %2 = arith.cmpi ne, %1, %c0_i32_0 : i32
    scf.if %2 {
      %cst_12 = arith.constant 0.000000e+00 : f32
      %16 = vector.broadcast %cst_12 : f32 to vector<1x8x8xf32>
      %c0_13 = arith.constant 0 : index
      %c0_14 = arith.constant 0 : index
      %c0_15 = arith.constant 0 : index
      %17 = vector.load %arg3[%c0_13, %c0_14, %c0_15] : memref<1x8x8xf32, #tpu.memory_space<vmem>>, vector<1x8x8xf32>
      tpu.vector_store %arg3[%c0_13, %c0_14, %c0_15], %16 {strides = array<i32>} : memref<1x8x8xf32, #tpu.memory_space<vmem>>, vector<1x8x8xf32>,
    } else {
    }
    %c0 = arith.constant 0 : index
    %c0_1 = arith.constant 0 : index
    %c0_2 = arith.constant 0 : index
    %3 = vector.load %arg2[%c0, %c0_1, %c0_2] : memref<2x8x128xf32, #tpu.memory_space<vmem>>, vector<2x8x128xf32>
    %cst = arith.constant dense<0.000000e+00> : vector<2x8xf32>
    %4 = vector.multi_reduction <add>, %3, %cst [2] : vector<2x8x128xf32> to vector<2x8xf32>
    %5 = vector.shape_cast %4 : vector<2x8xf32> to vector<2x8x1xf32>
    %cst_3 = arith.constant 1.280000e+02 : f32
    %6 = vector.broadcast %cst_3 : f32 to vector<2x8x1xf32>
    %7 = arith.divf %5, %6 : vector<2x8x1xf32>
    %8 = vector.broadcast %7 : vector<2x8x1xf32> to vector<2x8x128xf32>
    %9 = arith.subf %3, %8 : vector<2x8x128xf32>
    %cst_4 = arith.constant dense<0.000000e+00> : vector<2x8x8xf32>
    %10 = tpu.matmul %9, %9, %cst_4 {dimension_numbers = #tpu.dot_dimension_numbers<[2], [2], [1], [1], [0, 0, 0, 1, 1, 1], [0], [0]>} : vector<2x8x128xf32>, vector<2x8x128xf32>, vector<2x8x8xf32> -> vector<2x8x8xf32>
    %c0_5 = arith.constant 0 : index
    %c0_6 = arith.constant 0 : index
    %c0_7 = arith.constant 0 : index
    %11 = vector.load %arg3[%c0_5, %c0_6, %c0_7] : memref<1x8x8xf32, #tpu.memory_space<vmem>>, vector<1x8x8xf32>
    %cst_8 = arith.constant dense<0.000000e+00> : vector<8x8xf32>
    %12 = vector.multi_reduction <add>, %10, %cst_8 [0] : vector<2x8x8xf32> to vector<8x8xf32>
    %13 = vector.shape_cast %12 : vector<8x8xf32> to vector<1x8x8xf32>
    %14 = arith.addf %11, %13 : vector<1x8x8xf32>
    %c0_9 = arith.constant 0 : index
    %c0_10 = arith.constant 0 : index
    %c0_11 = arith.constant 0 : index
    %15 = vector.load %arg3[%c0_9, %c0_10, %c0_11] : memref<1x8x8xf32, #tpu.memory_space<vmem>>, vector<1x8x8xf32>
    tpu.vector_store %arg3[%c0_9, %c0_10, %c0_11], %14 {strides = array<i32>} : memref<1x8x8xf32, #tpu.memory_space<vmem>>, vector<1x8x8xf32>,
    return
  }
  func.func @transform_0(%arg0: i32, %arg1: i32) -> (i32, i32, i32) {
    %c1_i32 = arith.constant 1 : i32
    %0 = arith.muli %arg0, %c1_i32 : i32
    %1 = arith.addi %0, %arg1 : i32
    %c0_i32 = arith.constant 0 : i32
    %c0_i32_0 = arith.constant 0 : i32
    %c0_i32_1 = arith.constant 0 : i32
    return %1, %c0_i32, %c0_i32_0 : i32, i32, i32
  }
  func.func @transform_1(%arg0: i32, %arg1: i32) -> (i32, i32, i32) {
    %c0_i32 = arith.constant 0 : i32
    %c0_i32_0 = arith.constant 0 : i32
    %c0_i32_1 = arith.constant 0 : i32
    return %arg0, %c0_i32, %c0_i32_0 : i32, i32, i32
  }
}

</mosaic_0001>

<llo_original>
// kernel: tpu_custom_call.1
$region0: #{tpu_custom_call.1}
  #allocation0 [shape = 'u32[]', space=smem, size = 0x4, offset = 0x4, fixed_abs, tag = 'smem constant byte address 0x4 - core index']
  #allocation1 [shape = 'u32[72,128]{1,0:T(1,128)}', space=vmem, size = 0x9000, scoped, tag = 'internal scratch']
  %s0 = inlined_call_operand.hbm [shape: f32[4,8,128], index: 0, kind: input, shape index: {}]
  %s1 = inlined_call_operand.hbm [shape: f32[2,8,8], index: 1, kind: output, shape index: {}]
  %s2 = sld [smem:[#allocation0]]
  $region45: #{tpu_custom_call.1} parent=0
    _
  %s4 = ssub.s32 1, %s2
  %s5 = scalar_select 0, %s4, %s2
  $region1: #{tpu_custom_call.1} parent=0
    #allocation2 [shape = 'u8[16384]{0}', space=vmem, size = 0x4000, scoped, tag = 'input window, operand 0']
    #allocation3 [shape = 's32[2]{0}', space=sflag, size = 0x8, scoped, tag = 'scoped memory for tpu_custom_call.1']
    #allocation4 [shape = 's32[2]{0}', space=sflag, size = 0x8, scoped, tag = 'scoped memory for tpu_custom_call.1']
    #allocation5 [shape = 'u8[8192]{0}', space=vmem, size = 0x2000, scoped, tag = 'output window, operand 0']
    %6 = vsyncpa [#allocation3], 0
    %s7 = scalar_lea.sflag [#allocation3], 1
    %8 = vsyncpa %s7, 0
    %9 = vsyncpa [#allocation4], 0
    %s10 = scalar_lea.sflag [#allocation4], 1
    %11 = vsyncpa %s10, 0
    loop: start=0, step=1, limit=4
    $region2: #{tpu_custom_call.1} parent=1 // loop_pre_header
      _
    $region3: #{tpu_custom_call.1} parent=1 // loop_header
      %s13 = sphi 0, %s17
      %p14 = scmp.ge.s32.totalorder %s13, 4
      %s20 = sphi 0, %s32
      %s21 = sphi 0, %s28
      %s22 = sphi 0, %s20
      %s23 = sphi 0, %s21
      %s24 = sphi 0, %s22
      %s25 = sphi 0, %s23
      %s37 = sphi 0, %s39
      %s40 = sphi 0, %s37
      %s41 = sphi 0, %s40
      %s57 = sphi 0, %s41
      %s63 = sphi 0, %s65
      %s66 = sphi 0, %s63
      %s67 = sphi 0, %s66
      %s83 = sphi 0, %s67
    $region4: #{tpu_custom_call.1} parent=1 // loop_header_branch
      %16 = sbr.rel (%p14) target = $region8
    $region5: #{tpu_custom_call.1} parent=1 // loop_body
      %s18 = ssub.s32 %s13, 1
      %s19 = ssub.s32 %s13, 2
      %s26 = sadd.s32 1, %s21
      %p27 = scmp.ge.s32.totalorder %s26, 1
      %s28 = scalar_select %p27, 0, %s26
      %s29 = sadd.s32 1, %s20
      %s30 = scalar_select %p27, %s29, %s20
      %p31 = scmp.ge.s32.totalorder %s30, 2
      %s32 = scalar_select %p31, 0, %s30
      %s33 = sadd.s32 %s20, %s21
      %s34 = sadd.s32 %s32, %s28
      %s35 = ssub.s32 %s33, %s34
      %p36 = scmp.eq.s32.totalorder %s35, 0
      %s38 = sadd.s32 %s37, 1
      %s39 = scalar_select %p36, %s37, %s38
      %p42 = pneg %p36
      %p43 = scmp.eq.s32.totalorder %s13, 1
      %p44 = por %p42, %p43
      %p45 = scmp.ne.s32.totalorder %s37, %s40
      %p46 = scmp.eq.s32.totalorder %s13, 0
      %p47 = por %p45, %p46
      %p48 = scmp.ne.s32.totalorder %s37, %s40
      %p49 = scmp.eq.s32.totalorder %s18, 1
      %p50 = por %p48, %p49
      %p51 = scmp.ne.s32.totalorder %s40, %s41
      %p52 = scmp.eq.s32.totalorder %s18, 0
      %p53 = por %p51, %p52
      %p54 = scmp.ne.s32.totalorder %s40, %s41
      %p55 = scmp.eq.s32.totalorder %s19, 1
      %p56 = por %p54, %p55
      %p58 = scmp.ne.s32.totalorder %s41, %s57
      %p59 = scmp.eq.s32.totalorder %s19, 0
      %p60 = por %p58, %p59
      %s61 = ssub.s32 %s20, %s32
      %p62 = scmp.eq.s32.totalorder %s61, 0
      %s64 = sadd.s32 %s63, 1
      %s65 = scalar_select %p62, %s63, %s64
      %p68 = pneg %p62
      %p69 = scmp.eq.s32.totalorder %s13, 1
      %p70 = por %p68, %p69
      %p71 = scmp.ne.s32.totalorder %s63, %s66
      %p72 = scmp.eq.s32.totalorder %s13, 0
      %p73 = por %p71, %p72
      %p74 = scmp.ne.s32.totalorder %s63, %s66
      %p75 = scmp.eq.s32.totalorder %s18, 1
      %p76 = por %p74, %p75
      %p77 = scmp.ne.s32.totalorder %s66, %s67
      %p78 = scmp.eq.s32.totalorder %s18, 0
      %p79 = por %p77, %p78
      %p80 = scmp.ne.s32.totalorder %s66, %s67
      %p81 = scmp.eq.s32.totalorder %s19, 1
      %p82 = por %p80, %p81
      %p84 = scmp.ne.s32.totalorder %s67, %s83
      %p85 = scmp.eq.s32.totalorder %s19, 0
      %p86 = por %p84, %p85
      %p87 = scmp.le.s32.totalorder 1, %s13
      %p88 = scmp.lt.s32.totalorder %s13, 3
      %p89 = pnand %p87, %p88
      %p90 = pneg %p89
      // Predicated region
      $region9: #{tpu_custom_call.1} parent=5 // pred_check
        _
      $region10: #{tpu_custom_call.1} parent=5 // pred_check_branch
        %92 = sbr.rel (%p89) target = $region12
      $region11: #{tpu_custom_call.1} parent=5 // pred_region
        %s93 = ssub.s32 %s13, 1
      $region12: #{tpu_custom_call.1} parent=5 // pred_fallthru
        _
      %p94 = scmp.lt.s32.totalorder %s13, 2
      // Predicated region
      $region13: #{tpu_custom_call.1} parent=5 // pred_check
        %p95 = pneg %p94
      $region14: #{tpu_custom_call.1} parent=5 // pred_check_branch
        %97 = sbr.rel (%p95) target = $region16
      $region15: #{tpu_custom_call.1} parent=5 // pred_region
        // Predicated region
        $region17: #{tpu_custom_call.1} parent=15 // pred_check
          %p98 = pneg %p47
        $region18: #{tpu_custom_call.1} parent=15 // pred_check_branch
          %100 = sbr.rel (%p98) target = $region20
        $region19: #{tpu_custom_call.1} parent=15 // pred_region
          %s101 = sand.u32 %s37, 1
          %s102 = scalar_lea.sflag [#allocation3], %s101
          %s103 = sand.u32 %s37, 1
          %s104 = smul.addr %s103, 16
          %s105 = scalar_lea.vmem [#allocation2], %s104
          %s106 = sadd.s32 %s20, %s21
          %s107 = smul.u32 2, %s106
          %109 = vsyncadd %s102, 0
          %s110 = smul.addr %s107, 8
          %s111 = scalar_lea.hbm %s0, %s110
          %s112 = sshll.u32 %s111, 4
          %s113 = int_to_ptr.hbm [resolvable:$true] %s112
          %s114 = sshll.u32 %s105, 4
          %s115 = int_to_ptr.vmem [resolvable:$true] %s114
          %120 = dma.hbm_to_vmem [thread:$0]  %s113, 256, %s115, %s102, 128, 128, 8
        $region20: #{tpu_custom_call.1} parent=15 // pred_fallthru
          _
      $region16: #{tpu_custom_call.1} parent=5 // pred_fallthru
        _
      %p121 = scmp.le.s32.totalorder 1, %s13
      %p122 = scmp.lt.s32.totalorder %s13, 3
      %p123 = pnand %p121, %p122
      %p124 = pneg %p123
      // Predicated region
      $region21: #{tpu_custom_call.1} parent=5 // pred_check
        _
      $region22: #{tpu_custom_call.1} parent=5 // pred_check_branch
        %126 = sbr.rel (%p123) target = $region24
      $region23: #{tpu_custom_call.1} parent=5 // pred_region
        %s127 = ssub.s32 %s13, 1
        %s128 = sand.u32 %s40, 1
        %s129 = scalar_lea.sflag [#allocation3], %s128
        %s130 = sand.u32 %s40, 1
        %s131 = smul.addr %s130, 16
        %s132 = scalar_lea.vmem [#allocation2], %s131
        // Predicated region
        $region25: #{tpu_custom_call.1} parent=23 // pred_check
          %p133 = pneg %p53
        $region26: #{tpu_custom_call.1} parent=23 // pred_check_branch
          %135 = sbr.rel (%p133) target = $region28
        $region27: #{tpu_custom_call.1} parent=23 // pred_region
          %137 = dma.done %s129, 256
        $region28: #{tpu_custom_call.1} parent=23 // pred_fallthru
          _
        %s138 = sand.u32 %s40, 1
        %s139 = scalar_lea.sflag [#allocation3], %s138
        %s140 = sand.u32 %s40, 1
        %s141 = smul.addr %s140, 16
        %s142 = scalar_lea.vmem [#allocation2], %s141
        %p143 = pneg %p53
        %p144 = pneg %p50
        %p145 = pneg %p79
        %p146 = pneg %p76
        %s147 = sand.u32 %s66, 1
        %s148 = scalar_lea.sflag [#allocation4], %s147
        %s149 = sand.u32 %s66, 1
        %s150 = smul.addr %s149, 8
        %s151 = scalar_lea.vmem [#allocation5], %s150
        %s152 = sadd.s32 %s22, %s23
        %s153 = smul.u32 2, %s152
        %p154 = scmp.eq.s32.totalorder %s23, 0
        // Predicated region
        $region29: #{tpu_custom_call.1} parent=23 // pred_check
          %p155 = pneg %p154
        $region30: #{tpu_custom_call.1} parent=23 // pred_check_branch
          %157 = sbr.rel (%p155) target = $region32
        $region31: #{tpu_custom_call.1} parent=23 // pred_region
          %vm158 = vcmask 64512
          %159 = vst.msk [vmem:[%s151] sm:$0xff] %vm158, 0.0
        $region32: #{tpu_custom_call.1} parent=23 // pred_fallthru
          _
        %v160 = vld [vmem:[%s132] sm:$0xff]
        %v161 = vld [vmem:[%s132 + $0x8] sm:$0xff]
        %162 = vadd.xlane.f32.xlu0 %v160
        %v163 = vpop.xlane.xlu0 %162
        %164 = vadd.xlane.f32.xlu0 %v161
        %v165 = vpop.xlane.xlu0 %164
        %v166 = vrcp.pop 128.0
        %v167 = vmul.f32 128.0, %v166
        %v168 = vsub.f32 1.0, %v167
        %v169 = vmul.f32 %v166, %v168
        %v170 = vadd.f32 %v166, %v169
        %vm171 = vweird.f32 %v166
        %v172 = vsel %vm171, %v166, %v170
        %v173 = vmul.f32 %v163, %v172
        %v174 = vmul.f32 %v165, %v172
        %v175 = vsub.f32 %v160, %v173
        %v176 = vsub.f32 %v161, %v174
        %177 = vmatpush.xpose.msra.mxu0 0.0
        %178 = vmatpush.xpose.msra.mxu0 0.0
        %179 = vmatpush.xpose.msra.mxu0 0.0
        %180 = vmatpush.xpose.msra.mxu0 0.0
        %181 = vmatpush.xpose.msra.mxu0 0.0
        %182 = vmatpush.xpose.msra.mxu0 0.0
        %183 = vmatpush.xpose.msra.mxu0 0.0
        %184 = vmatpush.xpose.msra.mxu0 0.0
        %185 = vmatpush.xpose.msra.mxu0 0.0
        %186 = vmatpush.xpose.msra.mxu0 0.0
        %187 = vmatpush.xpose.msra.mxu0 0.0
        %188 = vmatpush.xpose.msra.mxu0 0.0
        %189 = vmatpush.xpose.msra.mxu0 0.0
        %190 = vmatpush.xpose.msra.mxu0 0.0
        %191 = vmatpush.xpose.msra.mxu0 0.0
        %192 = vmatpush.xpose.msra.mxu0 %v175
        %193 = vmatmul.f32.gmra.mxu0 %v175
        %v194 = vpop.f32.mrf.mxu0
        %v195 = vadd.f32 0.0, %v194
        %196 = vdwg.mxu0
        %197 = vmatpush.xpose.msra.mxu0 0.0
        %198 = vmatpush.xpose.msra.mxu0 0.0
        %199 = vmatpush.xpose.msra.mxu0 0.0
        %200 = vmatpush.xpose.msra.mxu0 0.0
        %201 = vmatpush.xpose.msra.mxu0 0.0
        %202 = vmatpush.xpose.msra.mxu0 0.0
        %203 = vmatpush.xpose.msra.mxu0 0.0
        %204 = vmatpush.xpose.msra.mxu0 0.0
        %205 = vmatpush.xpose.msra.mxu0 0.0
        %206 = vmatpush.xpose.msra.mxu0 0.0
        %207 = vmatpush.xpose.msra.mxu0 0.0
        %208 = vmatpush.xpose.msra.mxu0 0.0
        %209 = vmatpush.xpose.msra.mxu0 0.0
        %210 = vmatpush.xpose.msra.mxu0 0.0
        %211 = vmatpush.xpose.msra.mxu0 0.0
        %212 = vmatpush.xpose.msra.mxu0 %v176
        %213 = vmatmul.f32.gmra.mxu0 %v176
        %v214 = vpop.f32.mrf.mxu0
        %v215 = vadd.f32 0.0, %v214
        %216 = vdwg.mxu0
        %v217 = vld [vmem:[%s151] sm:$0xff]
        %vm218 = vcmask 64512
        %v219 = vsel %vm218, %v195, 0.0
        %v220 = vsel %vm218, %v215, 0.0
        %v221 = vadd.f32 %v219, %v220
        %v222 = vadd.f32 %v217, %v221
        %223 = vst.msk [vmem:[%s151] sm:$0xff] %vm218, %v222
        %s224 = sand.u32 %s66, 1
        %s225 = scalar_lea.sflag [#allocation4], %s224
        %s226 = sand.u32 %s66, 1
        %s227 = smul.addr %s226, 8
        %s228 = scalar_lea.vmem [#allocation5], %s227
        // Predicated region
        $region33: #{tpu_custom_call.1} parent=23 // pred_check
          %p229 = pneg %p76
        $region34: #{tpu_custom_call.1} parent=23 // pred_check_branch
          %231 = sbr.rel (%p229) target = $region36
        $region35: #{tpu_custom_call.1} parent=23 // pred_region
          %233 = vsyncadd %s225, 0
          %s234 = smul.addr %s22, 8
          %s235 = scalar_lea.hbm %s1, %s234
          %s237 = sshll.u32 %s228, 4
          %s238 = int_to_ptr.vmem [resolvable:$true] %s237
          %s239 = sshll.u32 %s235, 4
          %s240 = int_to_ptr.hbm [resolvable:$true] %s239
          %242 = dma.vmem_to_hbm [thread:$0]  %s238, 128, %s240, %s225
        $region36: #{tpu_custom_call.1} parent=23 // pred_fallthru
          _
      $region24: #{tpu_custom_call.1} parent=5 // pred_fallthru
        _
      %p243 = scmp.le.s32.totalorder 2, %s13
      // Predicated region
      $region37: #{tpu_custom_call.1} parent=5 // pred_check
        %p244 = pneg %p243
      $region38: #{tpu_custom_call.1} parent=5 // pred_check_branch
        %246 = sbr.rel (%p244) target = $region40
      $region39: #{tpu_custom_call.1} parent=5 // pred_region
        %s247 = ssub.s32 %s13, 2
        // Predicated region
        $region41: #{tpu_custom_call.1} parent=39 // pred_check
          %p248 = pneg %p82
        $region42: #{tpu_custom_call.1} parent=39 // pred_check_branch
          %250 = sbr.rel (%p248) target = $region44
        $region43: #{tpu_custom_call.1} parent=39 // pred_region
          %s251 = sand.u32 %s67, 1
          %s252 = scalar_lea.sflag [#allocation4], %s251
          %s253 = sand.u32 %s67, 1
          %s254 = smul.addr %s253, 8
          %s255 = scalar_lea.vmem [#allocation5], %s254
          %257 = dma.done %s252, 128
        $region44: #{tpu_custom_call.1} parent=39 // pred_fallthru
          _
      $region40: #{tpu_custom_call.1} parent=5 // pred_fallthru
        _
    $region6: #{tpu_custom_call.1} parent=1 // loop_footer
      %s17 = sadd.s32 1, %s13
    $region7: #{tpu_custom_call.1} parent=1 // loop_footer_branch
      %12 = sbr.rel target = $region3
    $region8: #{tpu_custom_call.1} parent=1 // loop_exit
      _
    %258 = vsyncpa [#allocation3], 1
    %s259 = scalar_lea.sflag [#allocation3], 1
    %260 = vsyncpa %s259, 1
    %261 = vsyncpa [#allocation4], 1
    %s262 = scalar_lea.sflag [#allocation4], 1
    %263 = vsyncpa %s262, 1

</llo_original>
